<compile_context>
chip_gen: v7x
topology: tpu7x:2x2x1
jax: 0.10.0
libtpu: 0.0.40
codegen_flags: <defaults>
</compile_context>

<pallas_src>
import jax
import jax.numpy as jnp
from jax.experimental import pallas as pl
from jax.experimental.pallas import tpu as pltpu


def _round_up(n, m):
    return ((n + m - 1) // m) * m


# ---------------------------------------------------------------------------
# Pallas kernel: one batch tile through the whole MLP
# ---------------------------------------------------------------------------
def nnmodel_kernel(x_ref,
                   w1_ref, b1_ref,
                   w2_ref, b2_ref,
                   w3_ref, b3_ref,
                   wo_ref, bo_ref,
                   out_ref):
    x = x_ref[...]                                                 # (TB, IN)

    # embeds[0]: Linear(input_size, emb_size) + ReLU
    h = jnp.dot(x, w1_ref[...], preferred_element_type=jnp.float32) + b1_ref[...]
    h = jnp.maximum(h, 0.0)

    # embeds[2]: XavierLinear(emb_size, hidden_size) + ReLU
    h = jnp.dot(h, w2_ref[...], preferred_element_type=jnp.float32) + b2_ref[...]
    h = jnp.maximum(h, 0.0)

    # linearlayers[0]: XavierLinear(hidden_size, hidden_size // 2) + ReLU
    h = jnp.dot(h, w3_ref[...], preferred_element_type=jnp.float32) + b3_ref[...]
    h = jnp.maximum(h, 0.0)                                        # (TB, 16)

    # output: Linear(16, 1) + sigmoid.
    # Computed transposed so the batch lands on the lane axis -> lane-dense
    # store; the 16->1 contraction is a VPU multiply + sublane reduce (keeps
    # the MXU drain off the critical path).
    h_t = h.T                                                      # (16, TB)
    logits_t = (jnp.sum(h_t * wo_ref[...], axis=0, keepdims=True)  # wo: (16, 1)
                + bo_ref[...])                                     # (1, TB)
    out_ref[...] = jax.nn.sigmoid(logits_t).astype(out_ref.dtype)


# ---------------------------------------------------------------------------
# Wrapper: batch-tiled pallas_call
# ---------------------------------------------------------------------------
def nnmodel_forward(x, params, *, block_batch=1024):
    """Full NNModel forward. x: (batch, input_size) f32. Returns (batch, 1)."""
    (w1, b1), (w2, b2), (w3, b3), (wo, bo) = params
    batch, in_size = x.shape
    out_size = wo.shape[1]
    # TODO(synk): kernel is specialized to the 4-layer / output_size==1 config;
    # other emb/input sizes or output_size>1 need a (straightforward) variant.
    assert out_size == 1, "binary model: kernel stores the single logit lane-dense"

    # Pick the batch tile: multiple of 8 (f32 sublane); when tiling is needed,
    # use a multiple of 128 so the (1, TB) output block is lane-aligned.
    if batch <= block_batch:
        tb = max(_round_up(batch, 8), 8)
        padded = tb
    else:
        tb = block_batch
        padded = _round_up(batch, tb)

    if padded != batch:
        x = jnp.pad(x, ((0, padded - batch), (0, 0)))

    grid = (padded // tb,)

    def const_spec(shape):
        # Full-array block, same block every grid step -> stays VMEM-resident.
        return pl.BlockSpec(shape, lambda i: tuple(0 for _ in shape))

    in_specs = [
        pl.BlockSpec((tb, in_size), lambda i: (i, 0)),   # x: tiled over batch rows
        const_spec(w1.shape), const_spec(b1.shape),
        const_spec(w2.shape), const_spec(b2.shape),
        const_spec(w3.shape), const_spec(b3.shape),
        const_spec(wo.shape), const_spec(bo.shape),
    ]
    out_specs = pl.BlockSpec((1, tb), lambda i: (0, i))  # lane-dense (1, TB) blocks

    param_bytes = sum(int(a.size) * a.dtype.itemsize for p in params for a in p)
    flops = 2 * padded * (w1.shape[0] * w1.shape[1] + w2.shape[0] * w2.shape[1]
                          + w3.shape[0] * w3.shape[1] + wo.shape[0] * wo.shape[1])
    bytes_accessed = int(x.size) * x.dtype.itemsize + padded * out_size * 4 + param_bytes

    out_t = pl.pallas_call(
        nnmodel_kernel,
        out_shape=jax.ShapeDtypeStruct((1, padded), jnp.float32),
        grid=grid,
        in_specs=in_specs,
        out_specs=out_specs,
        compiler_params=pltpu.CompilerParams(
            dimension_semantics=("parallel",)),
        cost_estimate=pl.CostEstimate(
            flops=flops,
            transcendentals=padded,
            bytes_accessed=bytes_accessed),
    )(x, w1, b1, w2, b2, w3, b3, wo, bo)

    # (1, padded) -> (batch, 1): contiguous prefix slice + free reshape.
    return out_t[0, :batch].reshape(batch, out_size)


# ---------------------------------------------------------------------------
# Deterministic parameter initialization (synthetic; mirrors module shapes)
# ---------------------------------------------------------------------------
def xavier_normal(key, fan_in, fan_out):
    std = jnp.sqrt(2.0 / (fan_in + fan_out))
    # stored as [in, out] (transposed vs. PyTorch's [out, in])
    return jax.random.normal(key, (fan_in, fan_out), dtype=jnp.float32) * std


def init_params(key, input_size, emb_size, output_size):
    hidden = emb_size // 2
    sizes = [input_size, emb_size, hidden]
    prev = hidden
    while prev > 16:
        prev //= 2
        sizes.append(prev)
    sizes.append(output_size)

    keys = jax.random.split(key, 2 * (len(sizes) - 1))
    params = []
    for idx, (fi, fo) in enumerate(zip(sizes[:-1], sizes[1:])):
        w = xavier_normal(keys[2 * idx], fi, fo)
        # The module zero-inits biases; use small random biases here so the
        # kernel's bias path is actually exercised (forward math is identical).
        b = 0.1 * jax.random.normal(keys[2 * idx + 1], (1, fo), dtype=jnp.float32)
        params.append((w, b))
    return params


def reference_forward(x, params):
    h = x
    n = len(params)
    for i, (w, b) in enumerate(params):
        h = h @ w + b
        if i < n - 1:
            h = jnp.maximum(h, 0.0)
    return jax.nn.sigmoid(h)


if __name__ == "__main__":
    INPUT_SIZE = 32
    EMB_SIZE = 64
    OUTPUT_SIZE = 1

    key = jax.random.PRNGKey(0)
    kx1, kx2, kp = jax.random.split(key, 3)

    params = init_params(kp, INPUT_SIZE, EMB_SIZE, OUTPUT_SIZE)
    # This config yields exactly 4 linear layers: 32 -> 64 -> 32 -> 16 -> 1
    assert len(params) == 4, "kernel is specialized to the 4-layer config"

    # Small check: single grid step (batch padded 2 -> 8).
    x_small = jax.random.normal(kx1, (2, INPUT_SIZE), dtype=jnp.float32)
    out_small = jax.block_until_ready(nnmodel_forward(x_small, params))
    ref_small = reference_forward(x_small, params)
    assert out_small.shape == (2, OUTPUT_SIZE)
    assert jnp.allclose(out_small, ref_small, atol=1e-5, rtol=1e-5), (out_small, ref_small)

    # Tiled check: exercises the batch grid (3 steps of 1024 rows) + padding.
    x_big = jax.random.normal(kx2, (2500, INPUT_SIZE), dtype=jnp.float32)
    out_big = jax.block_until_ready(nnmodel_forward(x_big, params))
    ref_big = reference_forward(x_big, params)
    assert out_big.shape == (2500, OUTPUT_SIZE)
    assert jnp.allclose(out_big, ref_big, atol=1e-5, rtol=1e-5)

    print("KERNEL_OK")
</pallas_src>

<mosaic_0001>
module attributes {stable_mosaic.version = 11 : i64} {
  func.func @nnmodel_kernel(%arg0: i32, %arg1: memref<8x32xf32, #tpu.memory_space<vmem>>, %arg2: memref<32x64xf32, #tpu.memory_space<vmem>>, %arg3: memref<1x64xf32, #tpu.memory_space<vmem>>, %arg4: memref<64x32xf32, #tpu.memory_space<vmem>>, %arg5: memref<1x32xf32, #tpu.memory_space<vmem>>, %arg6: memref<32x16xf32, #tpu.memory_space<vmem>>, %arg7: memref<1x16xf32, #tpu.memory_space<vmem>>, %arg8: memref<16x1xf32, #tpu.memory_space<vmem>>, %arg9: memref<1x1xf32, #tpu.memory_space<vmem>>, %arg10: memref<1x8xf32, #tpu.memory_space<vmem>>) attributes {dimension_semantics = [#tpu.dimension_semantics<parallel>], iteration_bounds = array<i64: 1>, scalar_prefetch = 0 : i64, scratch_operands = 0 : i64, tpu.core_type = #tpu.core_type<tc>, window_params = [{transform_indices = @transform_0, window_bounds = array<i64: 8, 32>}, {pipeline_mode = #tpu.pipeline_mode<synchronous>, transform_indices = @transform_1, window_bounds = array<i64: 32, 64>}, {pipeline_mode = #tpu.pipeline_mode<synchronous>, transform_indices = @transform_2, window_bounds = array<i64: 1, 64>}, {pipeline_mode = #tpu.pipeline_mode<synchronous>, transform_indices = @transform_3, window_bounds = array<i64: 64, 32>}, {pipeline_mode = #tpu.pipeline_mode<synchronous>, transform_indices = @transform_4, window_bounds = array<i64: 1, 32>}, {pipeline_mode = #tpu.pipeline_mode<synchronous>, transform_indices = @transform_5, window_bounds = array<i64: 32, 16>}, {pipeline_mode = #tpu.pipeline_mode<synchronous>, transform_indices = @transform_6, window_bounds = array<i64: 1, 16>}, {pipeline_mode = #tpu.pipeline_mode<synchronous>, transform_indices = @transform_7, window_bounds = array<i64: 16, 1>}, {pipeline_mode = #tpu.pipeline_mode<synchronous>, transform_indices = @transform_8, window_bounds = array<i64: 1, 1>}, {transform_indices = @transform_9, window_bounds = array<i64: 1, 8>}]} {
    %c0 = arith.constant 0 : index
    %c0_0 = arith.constant 0 : index
    %0 = vector.load %arg1[%c0, %c0_0] : memref<8x32xf32, #tpu.memory_space<vmem>>, vector<8x32xf32>
    %c0_1 = arith.constant 0 : index
    %c0_2 = arith.constant 0 : index
    %1 = vector.load %arg2[%c0_1, %c0_2] : memref<32x64xf32, #tpu.memory_space<vmem>>, vector<32x64xf32>
    %cst = arith.constant dense<0.000000e+00> : vector<8x64xf32>
    %2 = tpu.matmul %0, %1, %cst {dimension_numbers = #tpu.dot_dimension_numbers<[1], [0], [0], [1], [0, 0, 1, 1], [], []>} : vector<8x32xf32>, vector<32x64xf32>, vector<8x64xf32> -> vector<8x64xf32>
    %c0_3 = arith.constant 0 : index
    %c0_4 = arith.constant 0 : index
    %3 = vector.load %arg3[%c0_3, %c0_4] : memref<1x64xf32, #tpu.memory_space<vmem>>, vector<1x64xf32>
    %4 = vector.broadcast %3 : vector<1x64xf32> to vector<8x64xf32>
    %5 = arith.addf %2, %4 : vector<8x64xf32>
    %cst_5 = arith.constant 0.000000e+00 : f32
    %6 = vector.broadcast %cst_5 : f32 to vector<8x64xf32>
    %7 = arith.maximumf %5, %6 : vector<8x64xf32>
    %c0_6 = arith.constant 0 : index
    %c0_7 = arith.constant 0 : index
    %8 = vector.load %arg4[%c0_6, %c0_7] : memref<64x32xf32, #tpu.memory_space<vmem>>, vector<64x32xf32>
    %cst_8 = arith.constant dense<0.000000e+00> : vector<8x32xf32>
    %9 = tpu.matmul %7, %8, %cst_8 {dimension_numbers = #tpu.dot_dimension_numbers<[1], [0], [0], [1], [0, 0, 1, 1], [], []>} : vector<8x64xf32>, vector<64x32xf32>, vector<8x32xf32> -> vector<8x32xf32>
    %c0_9 = arith.constant 0 : index
    %c0_10 = arith.constant 0 : index
    %10 = vector.load %arg5[%c0_9, %c0_10] : memref<1x32xf32, #tpu.memory_space<vmem>>, vector<1x32xf32>
    %11 = vector.broadcast %10 : vector<1x32xf32> to vector<8x32xf32>
    %12 = arith.addf %9, %11 : vector<8x32xf32>
    %cst_11 = arith.constant 0.000000e+00 : f32
    %13 = vector.broadcast %cst_11 : f32 to vector<8x32xf32>
    %14 = arith.maximumf %12, %13 : vector<8x32xf32>
    %c0_12 = arith.constant 0 : index
    %c0_13 = arith.constant 0 : index
    %15 = vector.load %arg6[%c0_12, %c0_13] : memref<32x16xf32, #tpu.memory_space<vmem>>, vector<32x16xf32>
    %cst_14 = arith.constant dense<0.000000e+00> : vector<8x16xf32>
    %16 = tpu.matmul %14, %15, %cst_14 {dimension_numbers = #tpu.dot_dimension_numbers<[1], [0], [0], [1], [0, 0, 1, 1], [], []>} : vector<8x32xf32>, vector<32x16xf32>, vector<8x16xf32> -> vector<8x16xf32>
    %c0_15 = arith.constant 0 : index
    %c0_16 = arith.constant 0 : index
    %17 = vector.load %arg7[%c0_15, %c0_16] : memref<1x16xf32, #tpu.memory_space<vmem>>, vector<1x16xf32>
    %18 = vector.broadcast %17 : vector<1x16xf32> to vector<8x16xf32>
    %19 = arith.addf %16, %18 : vector<8x16xf32>
    %cst_17 = arith.constant 0.000000e+00 : f32
    %20 = vector.broadcast %cst_17 : f32 to vector<8x16xf32>
    %21 = arith.maximumf %19, %20 : vector<8x16xf32>
    %22 = tpu.transpose %21, [1, 0] : vector<8x16xf32> -> vector<16x8xf32>
    %c0_18 = arith.constant 0 : index
    %c0_19 = arith.constant 0 : index
    %23 = vector.load %arg8[%c0_18, %c0_19] : memref<16x1xf32, #tpu.memory_space<vmem>>, vector<16x1xf32>
    %24 = vector.broadcast %23 : vector<16x1xf32> to vector<16x8xf32>
    %25 = arith.mulf %22, %24 : vector<16x8xf32>
    %cst_20 = arith.constant dense<0.000000e+00> : vector<8xf32>
    %26 = vector.multi_reduction <add>, %25, %cst_20 [0] : vector<16x8xf32> to vector<8xf32>
    %27 = vector.shape_cast %26 : vector<8xf32> to vector<1x8xf32>
    %c0_21 = arith.constant 0 : index
    %c0_22 = arith.constant 0 : index
    %28 = vector.load %arg9[%c0_21, %c0_22] : memref<1x1xf32, #tpu.memory_space<vmem>>, vector<1x1xf32>
    %29 = vector.broadcast %28 : vector<1x1xf32> to vector<1x8xf32>
    %30 = arith.addf %27, %29 : vector<1x8xf32>
    %31 = arith.negf %30 : vector<1x8xf32>
    %32 = math.exp %31 : vector<1x8xf32>
    %cst_23 = arith.constant 1.000000e+00 : f32
    %33 = vector.broadcast %cst_23 : f32 to vector<1x8xf32>
    %34 = arith.addf %33, %32 : vector<1x8xf32>
    %35 = arith.divf %33, %34 : vector<1x8xf32>
    %c0_24 = arith.constant 0 : index
    %c0_25 = arith.constant 0 : index
    %36 = vector.load %arg10[%c0_24, %c0_25] : memref<1x8xf32, #tpu.memory_space<vmem>>, vector<1x8xf32>
    tpu.vector_store %arg10[%c0_24, %c0_25], %35 {strides = array<i32>} : memref<1x8xf32, #tpu.memory_space<vmem>>, vector<1x8xf32>,
    return
  }
  func.func @transform_0(%arg0: i32) -> (i32, i32) {
    %c0_i32 = arith.constant 0 : i32
    %c0_i32_0 = arith.constant 0 : i32
    return %arg0, %c0_i32 : i32, i32
  }
  func.func @transform_1(%arg0: i32) -> (i32, i32) {
    %c0_i32 = arith.constant 0 : i32
    %c0_i32_0 = arith.constant 0 : i32
    %c0_i32_1 = arith.constant 0 : i32
    return %c0_i32, %c0_i32_0 : i32, i32
  }
  func.func @transform_2(%arg0: i32) -> (i32, i32) {
    %c0_i32 = arith.constant 0 : i32
    %c0_i32_0 = arith.constant 0 : i32
    %c0_i32_1 = arith.constant 0 : i32
    return %c0_i32, %c0_i32_0 : i32, i32
  }
  func.func @transform_3(%arg0: i32) -> (i32, i32) {
    %c0_i32 = arith.constant 0 : i32
    %c0_i32_0 = arith.constant 0 : i32
    %c0_i32_1 = arith.constant 0 : i32
    return %c0_i32, %c0_i32_0 : i32, i32
  }
  func.func @transform_4(%arg0: i32) -> (i32, i32) {
    %c0_i32 = arith.constant 0 : i32
    %c0_i32_0 = arith.constant 0 : i32
    %c0_i32_1 = arith.constant 0 : i32
    return %c0_i32, %c0_i32_0 : i32, i32
  }
  func.func @transform_5(%arg0: i32) -> (i32, i32) {
    %c0_i32 = arith.constant 0 : i32
    %c0_i32_0 = arith.constant 0 : i32
    %c0_i32_1 = arith.constant 0 : i32
    return %c0_i32, %c0_i32_0 : i32, i32
  }
  func.func @transform_6(%arg0: i32) -> (i32, i32) {
    %c0_i32 = arith.constant 0 : i32
    %c0_i32_0 = arith.constant 0 : i32
    %c0_i32_1 = arith.constant 0 : i32
    return %c0_i32, %c0_i32_0 : i32, i32
  }
  func.func @transform_7(%arg0: i32) -> (i32, i32) {
    %c0_i32 = arith.constant 0 : i32
    %c0_i32_0 = arith.constant 0 : i32
    %c0_i32_1 = arith.constant 0 : i32
    return %c0_i32, %c0_i32_0 : i32, i32
  }
  func.func @transform_8(%arg0: i32) -> (i32, i32) {
    %c0_i32 = arith.constant 0 : i32
    %c0_i32_0 = arith.constant 0 : i32
    %c0_i32_1 = arith.constant 0 : i32
    return %c0_i32, %c0_i32_0 : i32, i32
  }
  func.func @transform_9(%arg0: i32) -> (i32, i32) {
    %c0_i32 = arith.constant 0 : i32
    %c0_i32_0 = arith.constant 0 : i32
    return %c0_i32, %arg0 : i32, i32
  }
}

</mosaic_0001>

<llo_original>
// kernel: tpu_custom_call.1
$region0: #{tpu_custom_call.1}
  #allocation0 [shape = 'u32[]', space=smem, size = 0x4, offset = 0x4, fixed_abs, tag = 'smem constant byte address 0x4 - core index']
  #allocation1 [shape = 'u32[144,128]{1,0:T(1,128)}', space=vmem, size = 0x12000, scoped, tag = 'internal scratch']
  #allocation2 [shape = 'f32[1,1]{1,0:T(1,128)S(1)}', space=vmem, size = 0x200, scoped, tag = 'scoped memory for tpu_custom_call.1']
  %s0 = inlined_call_operand.vmem [shape: f32[8,32], index: 0, kind: input, shape index: {}]
  %s1 = inlined_call_operand.vmem [shape: f32[32,64], index: 1, kind: input, shape index: {}]
  %s2 = inlined_call_operand.vmem [shape: f32[1,64], index: 2, kind: input, shape index: {}]
  %s3 = inlined_call_operand.vmem [shape: f32[64,32], index: 3, kind: input, shape index: {}]
  %s4 = inlined_call_operand.vmem [shape: f32[1,32], index: 4, kind: input, shape index: {}]
  %s5 = inlined_call_operand.vmem [shape: f32[32,16], index: 5, kind: input, shape index: {}]
  %s6 = inlined_call_operand.vmem [shape: f32[1,16], index: 6, kind: input, shape index: {}]
  %s7 = inlined_call_operand.vmem [shape: f32[16,1], index: 7, kind: input, shape index: {}]
  %s8 = inlined_call_operand.<no memory space> [shape: f32[1,1], index: 8, kind: input, shape index: {}]
  %s9 = inlined_call_operand.hbm [shape: f32[1,8], index: 9, kind: output, shape index: {}]
  %s10 = sld [smem:[#allocation0]]
  $region46: #{tpu_custom_call.1} parent=0
    _
  %s12 = ssub.s32 1, %s10
  %s13 = scalar_select 0, %s12, %s10
  %v14 = vstv %s8
  %15 = vst [vmem:[#allocation2] sm:$0x1] %v14
  $region1: #{tpu_custom_call.1} parent=0
    #allocation3 [shape = 'u8[512]{0}', space=vmem, size = 0x400, scoped, tag = 'output window, operand 0, single buffered']
    #allocation4 [shape = 's32[1]{0}', space=sflag, size = 0x4, scoped, tag = 'scoped memory for tpu_custom_call.1']
    %16 = vsyncpa [#allocation4], 0
    // Predicated region
    $region2: #{tpu_custom_call.1} parent=1 // pred_check
      _
    $region3: #{tpu_custom_call.1} parent=1 // pred_check_branch
      %18 = sbr.rel (0) target = $region5
    $region4: #{tpu_custom_call.1} parent=1 // pred_region
      _
    $region5: #{tpu_custom_call.1} parent=1 // pred_fallthru
      _
    // Predicated region
    $region6: #{tpu_custom_call.1} parent=1 // pred_check
      _
    $region7: #{tpu_custom_call.1} parent=1 // pred_check_branch
      %20 = sbr.rel (0) target = $region9
    $region8: #{tpu_custom_call.1} parent=1 // pred_region
      _
    $region9: #{tpu_custom_call.1} parent=1 // pred_fallthru
      _
    // Predicated region
    $region10: #{tpu_custom_call.1} parent=1 // pred_check
      _
    $region11: #{tpu_custom_call.1} parent=1 // pred_check_branch
      %22 = sbr.rel (0) target = $region13
    $region12: #{tpu_custom_call.1} parent=1 // pred_region
      _
    $region13: #{tpu_custom_call.1} parent=1 // pred_fallthru
      _
    // Predicated region
    $region14: #{tpu_custom_call.1} parent=1 // pred_check
      _
    $region15: #{tpu_custom_call.1} parent=1 // pred_check_branch
      %24 = sbr.rel (0) target = $region17
    $region16: #{tpu_custom_call.1} parent=1 // pred_region
      _
    $region17: #{tpu_custom_call.1} parent=1 // pred_fallthru
      _
    // Predicated region
    $region18: #{tpu_custom_call.1} parent=1 // pred_check
      _
    $region19: #{tpu_custom_call.1} parent=1 // pred_check_branch
      %26 = sbr.rel (0) target = $region21
    $region20: #{tpu_custom_call.1} parent=1 // pred_region
      _
    $region21: #{tpu_custom_call.1} parent=1 // pred_fallthru
      _
    // Predicated region
    $region22: #{tpu_custom_call.1} parent=1 // pred_check
      _
    $region23: #{tpu_custom_call.1} parent=1 // pred_check_branch
      %28 = sbr.rel (0) target = $region25
    $region24: #{tpu_custom_call.1} parent=1 // pred_region
      _
    $region25: #{tpu_custom_call.1} parent=1 // pred_fallthru
      _
    // Predicated region
    $region26: #{tpu_custom_call.1} parent=1 // pred_check
      _
    $region27: #{tpu_custom_call.1} parent=1 // pred_check_branch
      %30 = sbr.rel (0) target = $region29
    $region28: #{tpu_custom_call.1} parent=1 // pred_region
      _
    $region29: #{tpu_custom_call.1} parent=1 // pred_fallthru
      _
    // Predicated region
    $region30: #{tpu_custom_call.1} parent=1 // pred_check
      _
    $region31: #{tpu_custom_call.1} parent=1 // pred_check_branch
      %32 = sbr.rel (0) target = $region33
    $region32: #{tpu_custom_call.1} parent=1 // pred_region
      _
    $region33: #{tpu_custom_call.1} parent=1 // pred_fallthru
      _
    // Predicated region
    $region34: #{tpu_custom_call.1} parent=1 // pred_check
      _
    $region35: #{tpu_custom_call.1} parent=1 // pred_check_branch
      %34 = sbr.rel (0) target = $region37
    $region36: #{tpu_custom_call.1} parent=1 // pred_region
      _
    $region37: #{tpu_custom_call.1} parent=1 // pred_fallthru
      _
    %v35 = vld [vmem:[%s0] sm:$0xff]
    %v36 = vld [vmem:[%s1] sm:$0xff]
    %v37 = vld [vmem:[%s1 + $0x8] sm:$0xff]
    %v38 = vld [vmem:[%s1 + $0x10] sm:$0xff]
    %v39 = vld [vmem:[%s1 + $0x18] sm:$0xff]
    %v40 = vld [vmem:[%s2] sm:$0x1]
    %v42 = vlaneseq
    %v43 = vshrl.u32 %v42, 7
    %v44 = vsub.s32 0, %v43
    %v45 = vrot.slane %v40, %v44
    %vm47 = vcmask 261120
    %v49 = vsel %vm47, %v35, 0
    %51 = vmatprep.subr.mxu0 0.0
    %52 = vmatpush1.msra.mxu0 %v36
    %53 = vmatprep.subr.mxu0 0.0
    %54 = vmatpush1.msra.mxu0 %v37
    %55 = vmatprep.subr.mxu0 0.0
    %56 = vmatpush1.msra.mxu0 %v38
    %57 = vmatprep.subr.mxu0 0.0
    %58 = vmatpush1.msra.mxu0 %v39
    %59 = vmatprep.subr.mxu0 0.0
    %60 = vmatpush1.msra.mxu0 0.0
    %61 = vmatprep.subr.mxu0 0.0
    %62 = vmatpush1.msra.mxu0 0.0
    %63 = vmatprep.subr.mxu0 0.0
    %64 = vmatpush1.msra.mxu0 0.0
    %65 = vmatprep.subr.mxu0 0.0
    %66 = vmatpush1.msra.mxu0 0.0
    %67 = vmatprep.subr.mxu0 0.0
    %68 = vmatpush1.msra.mxu0 0.0
    %69 = vmatprep.subr.mxu0 0.0
    %70 = vmatpush1.msra.mxu0 0.0
    %71 = vmatprep.subr.mxu0 0.0
    %72 = vmatpush1.msra.mxu0 0.0
    %73 = vmatprep.subr.mxu0 0.0
    %74 = vmatpush1.msra.mxu0 0.0
    %75 = vmatprep.subr.mxu0 0.0
    %76 = vmatpush1.msra.mxu0 0.0
    %77 = vmatprep.subr.mxu0 0.0
    %78 = vmatpush1.msra.mxu0 0.0
    %79 = vmatprep.subr.mxu0 0.0
    %80 = vmatpush1.msra.mxu0 0.0
    %81 = vmatprep.subr.mxu0 0.0
    %82 = vmatpush1.msra.mxu0 0.0
    %83 = vmatprep.subr.mxu0 0.0
    %84 = vmatpush1.msra.mxu0 0.0
    %85 = vmatprep.subr.mxu0 0.0
    %86 = vmatpush1.msra.mxu0 0.0
    %87 = vmatprep.subr.mxu0 0.0
    %88 = vmatpush1.msra.mxu0 0.0
    %89 = vmatprep.subr.mxu0 0.0
    %90 = vmatpush1.msra.mxu0 0.0
    %91 = vmatprep.subr.mxu0 0.0
    %92 = vmatpush1.msra.mxu0 0.0
    %93 = vmatprep.subr.mxu0 0.0
    %94 = vmatpush1.msra.mxu0 0.0
    %95 = vmatprep.subr.mxu0 0.0
    %96 = vmatpush1.msra.mxu0 0.0
    %97 = vmatprep.subr.mxu0 0.0
    %98 = vmatpush1.msra.mxu0 0.0
    %99 = vmatprep.subr.mxu0 0.0
    %100 = vmatpush1.msra.mxu0 0.0
    %101 = vmatprep.subr.mxu0 0.0
    %102 = vmatpush1.msra.mxu0 0.0
    %103 = vmatprep.subr.mxu0 0.0
    %104 = vmatpush1.msra.mxu0 0.0
    %105 = vmatprep.subr.mxu0 0.0
    %106 = vmatpush1.msra.mxu0 0.0
    %107 = vmatprep.subr.mxu0 0.0
    %108 = vmatpush1.msra.mxu0 0.0
    %109 = vmatprep.subr.mxu0 0.0
    %110 = vmatpush1.msra.mxu0 0.0
    %111 = vmatprep.subr.mxu0 0.0
    %112 = vmatpush1.msra.mxu0 0.0
    %113 = vmatprep.subr.mxu0 0.0
    %114 = vmatpush1.msra.mxu0 0.0
    %115 = vmatprep.mubr.f32.mxu0 0.0
    %116 = vmatmul.mubr.f32.gmra.mrb[0].mxu0 %v49
    %v117 = vpop.f32.mrb[0].mxu0
    %v118 = vadd.f32 %v45, %v117
    %v119 = vpop.f32.mrb[0].mxu0
    %120 = vdwg.mxu0
    %v121 = vmax.f32 %v118, 0.0
    %v122 = vld [vmem:[%s3] sm:$0xff]
    %v123 = vld [vmem:[%s3 + $0x8] sm:$0xff]
    %v124 = vld [vmem:[%s3 + $0x10] sm:$0xff]
    %v125 = vld [vmem:[%s3 + $0x18] sm:$0xff]
    %v126 = vld [vmem:[%s3 + $0x20] sm:$0xff]
    %v127 = vld [vmem:[%s3 + $0x28] sm:$0xff]
    %v128 = vld [vmem:[%s3 + $0x30] sm:$0xff]
    %v129 = vld [vmem:[%s3 + $0x38] sm:$0xff]
    %v130 = vld [vmem:[%s4] sm:$0x1]
    %v132 = vlaneseq
    %v133 = vshrl.u32 %v132, 7
    %v134 = vsub.s32 0, %v133
    %v135 = vrot.slane %v130, %v134
    %vm137 = vcmask 523264
    %v139 = vsel %vm137, %v121, 0
    %141 = vmatprep.subr.mxu0 0.0
    %142 = vmatpush1.msra.mxu0 %v122
    %143 = vmatprep.subr.mxu0 0.0
    %144 = vmatpush1.msra.mxu0 %v123
    %145 = vmatprep.subr.mxu0 0.0
    %146 = vmatpush1.msra.mxu0 %v124
    %147 = vmatprep.subr.mxu0 0.0
    %148 = vmatpush1.msra.mxu0 %v125
    %149 = vmatprep.subr.mxu0 0.0
    %150 = vmatpush1.msra.mxu0 %v126
    %151 = vmatprep.subr.mxu0 0.0
    %152 = vmatpush1.msra.mxu0 %v127
    %153 = vmatprep.subr.mxu0 0.0
    %154 = vmatpush1.msra.mxu0 %v128
    %155 = vmatprep.subr.mxu0 0.0
    %156 = vmatpush1.msra.mxu0 %v129
    %157 = vmatprep.subr.mxu0 0.0
    %158 = vmatpush1.msra.mxu0 0.0
    %159 = vmatprep.subr.mxu0 0.0
    %160 = vmatpush1.msra.mxu0 0.0
    %161 = vmatprep.subr.mxu0 0.0
    %162 = vmatpush1.msra.mxu0 0.0
    %163 = vmatprep.subr.mxu0 0.0
    %164 = vmatpush1.msra.mxu0 0.0
    %165 = vmatprep.subr.mxu0 0.0
    %166 = vmatpush1.msra.mxu0 0.0
    %167 = vmatprep.subr.mxu0 0.0
    %168 = vmatpush1.msra.mxu0 0.0
    %169 = vmatprep.subr.mxu0 0.0
    %170 = vmatpush1.msra.mxu0 0.0
    %171 = vmatprep.subr.mxu0 0.0
    %172 = vmatpush1.msra.mxu0 0.0
    %173 = vmatprep.subr.mxu0 0.0
    %174 = vmatpush1.msra.mxu0 0.0
    %175 = vmatprep.subr.mxu0 0.0
    %176 = vmatpush1.msra.mxu0 0.0
    %177 = vmatprep.subr.mxu0 0.0
    %178 = vmatpush1.msra.mxu0 0.0
    %179 = vmatprep.subr.mxu0 0.0
    %180 = vmatpush1.msra.mxu0 0.0
    %181 = vmatprep.subr.mxu0 0.0
    %182 = vmatpush1.msra.mxu0 0.0
    %183 = vmatprep.subr.mxu0 0.0
    %184 = vmatpush1.msra.mxu0 0.0
    %185 = vmatprep.subr.mxu0 0.0
    %186 = vmatpush1.msra.mxu0 0.0
    %187 = vmatprep.subr.mxu0 0.0
    %188 = vmatpush1.msra.mxu0 0.0
    %189 = vmatprep.subr.mxu0 0.0
    %190 = vmatpush1.msra.mxu0 0.0
    %191 = vmatprep.subr.mxu0 0.0
    %192 = vmatpush1.msra.mxu0 0.0
    %193 = vmatprep.subr.mxu0 0.0
    %194 = vmatpush1.msra.mxu0 0.0
    %195 = vmatprep.subr.mxu0 0.0
    %196 = vmatpush1.msra.mxu0 0.0
    %197 = vmatprep.subr.mxu0 0.0
    %198 = vmatpush1.msra.mxu0 0.0
    %199 = vmatprep.subr.mxu0 0.0
    %200 = vmatpush1.msra.mxu0 0.0
    %201 = vmatprep.subr.mxu0 0.0
    %202 = vmatpush1.msra.mxu0 0.0
    %203 = vmatprep.subr.mxu0 0.0
    %204 = vmatpush1.msra.mxu0 0.0
    %205 = vmatprep.mubr.f32.mxu0 0.0
    %206 = vmatmul.mubr.f32.gmra.mrb[0].mxu0 %v139
    %v207 = vpop.f32.mrb[0].mxu0
    %v208 = vadd.f32 %v135, %v207
    %v209 = vpop.f32.mrb[0].mxu0
    %210 = vdwg.mxu0
    %v211 = vmax.f32 %v208, 0.0
    %v212 = vld [vmem:[%s5] sm:$0xff]
    %v213 = vld [vmem:[%s5 + $0x8] sm:$0xff]
    %v214 = vld [vmem:[%s5 + $0x10] sm:$0xff]
    %v215 = vld [vmem:[%s5 + $0x18] sm:$0xff]
    %v216 = vld [vmem:[%s6] sm:$0x1]
    %v218 = vlaneseq
    %v219 = vshrl.u32 %v218, 7
    %v220 = vsub.s32 0, %v219
    %v221 = vrot.slane %v216, %v220
    %v224 = vsel %vm47, %v211, 0
    %226 = vmatprep.subr.mxu0 0.0
    %227 = vmatpush1.msra.mxu0 %v212
    %228 = vmatprep.subr.mxu0 0.0
    %229 = vmatpush1.msra.mxu0 %v213
    %230 = vmatprep.subr.mxu0 0.0
    %231 = vmatpush1.msra.mxu0 %v214
    %232 = vmatprep.subr.mxu0 0.0
    %233 = vmatpush1.msra.mxu0 %v215
    %234 = vmatprep.subr.mxu0 0.0
    %235 = vmatpush1.msra.mxu0 0.0
    %236 = vmatprep.subr.mxu0 0.0
    %237 = vmatpush1.msra.mxu0 0.0
    %238 = vmatprep.subr.mxu0 0.0
    %239 = vmatpush1.msra.mxu0 0.0
    %240 = vmatprep.subr.mxu0 0.0
    %241 = vmatpush1.msra.mxu0 0.0
    %242 = vmatprep.subr.mxu0 0.0
    %243 = vmatpush1.msra.mxu0 0.0
    %244 = vmatprep.subr.mxu0 0.0
    %245 = vmatpush1.msra.mxu0 0.0
    %246 = vmatprep.subr.mxu0 0.0
    %247 = vmatpush1.msra.mxu0 0.0
    %248 = vmatprep.subr.mxu0 0.0
    %249 = vmatpush1.msra.mxu0 0.0
    %250 = vmatprep.subr.mxu0 0.0
    %251 = vmatpush1.msra.mxu0 0.0
    %252 = vmatprep.subr.mxu0 0.0
    %253 = vmatpush1.msra.mxu0 0.0
    %254 = vmatprep.subr.mxu0 0.0
    %255 = vmatpush1.msra.mxu0 0.0
    %256 = vmatprep.subr.mxu0 0.0
    %257 = vmatpush1.msra.mxu0 0.0
    %258 = vmatprep.subr.mxu0 0.0
    %259 = vmatpush1.msra.mxu0 0.0
    %260 = vmatprep.subr.mxu0 0.0
    %261 = vmatpush1.msra.mxu0 0.0
    %262 = vmatprep.subr.mxu0 0.0
    %263 = vmatpush1.msra.mxu0 0.0
    %264 = vmatprep.subr.mxu0 0.0
    %265 = vmatpush1.msra.mxu0 0.0
    %266 = vmatprep.subr.mxu0 0.0
    %267 = vmatpush1.msra.mxu0 0.0
    %268 = vmatprep.subr.mxu0 0.0
    %269 = vmatpush1.msra.mxu0 0.0
    %270 = vmatprep.subr.mxu0 0.0
    %271 = vmatpush1.msra.mxu0 0.0
    %272 = vmatprep.subr.mxu0 0.0
    %273 = vmatpush1.msra.mxu0 0.0
    %274 = vmatprep.subr.mxu0 0.0
    %275 = vmatpush1.msra.mxu0 0.0
    %276 = vmatprep.subr.mxu0 0.0
    %277 = vmatpush1.msra.mxu0 0.0
    %278 = vmatprep.subr.mxu0 0.0
    %279 = vmatpush1.msra.mxu0 0.0
    %280 = vmatprep.subr.mxu0 0.0
    %281 = vmatpush1.msra.mxu0 0.0
    %282 = vmatprep.subr.mxu0 0.0
    %283 = vmatpush1.msra.mxu0 0.0
    %284 = vmatprep.subr.mxu0 0.0
    %285 = vmatpush1.msra.mxu0 0.0
    %286 = vmatprep.subr.mxu0 0.0
    %287 = vmatpush1.msra.mxu0 0.0
    %288 = vmatprep.subr.mxu0 0.0
    %289 = vmatpush1.msra.mxu0 0.0
    %290 = vmatprep.mubr.f32.mxu0 0.0
    %291 = vmatmul.mubr.f32.gmra.mrb[0].mxu0 %v224
    %v292 = vpop.f32.mrb[0].mxu0
    %v293 = vadd.f32 %v221, %v292
    %v294 = vpop.f32.mrb[0].mxu0
    %295 = vdwg.mxu0
    %v296 = vmax.f32 %v293, 0.0
    %297 = vxpose.xlu0.b32.start [1/16] %v296, 128
    %298 = vxpose.xlu0.b32.cont [2/16] 0.0, 128
    %299 = vxpose.xlu0.b32.cont [3/16] 0.0, 128
    %300 = vxpose.xlu0.b32.cont [4/16] 0.0, 128
    %301 = vxpose.xlu0.b32.cont [5/16] 0.0, 128
    %302 = vxpose.xlu0.b32.cont [6/16] 0.0, 128
    %303 = vxpose.xlu0.b32.cont [7/16] 0.0, 128
    %304 = vxpose.xlu0.b32.cont [8/16] 0.0, 128
    %305 = vxpose.xlu0.b32.cont [9/16] 0.0, 128
    %306 = vxpose.xlu0.b32.cont [10/16] 0.0, 128
    %307 = vxpose.xlu0.b32.cont [11/16] 0.0, 128
    %308 = vxpose.xlu0.b32.cont [12/16] 0.0, 128
    %309 = vxpose.xlu0.b32.cont [13/16] 0.0, 128
    %310 = vxpose.xlu0.b32.cont [14/16] 0.0, 128
    %311 = vxpose.xlu0.b32.cont [15/16] 0.0, 128
    %312 = vxpose.xlu0.b32.end [16/16] 0.0, 128
    %v313 = vpop.trf.xlu0
    %v314 = vpop.trf.xlu0
    %v315 = vpop.trf.xlu0
    %v316 = vpop.trf.xlu0
    %v317 = vpop.trf.xlu0
    %v318 = vpop.trf.xlu0
    %v319 = vpop.trf.xlu0
    %v320 = vpop.trf.xlu0
    %v321 = vpop.trf.xlu0
    %v322 = vpop.trf.xlu0
    %v323 = vpop.trf.xlu0
    %v324 = vpop.trf.xlu0
    %v325 = vpop.trf.xlu0
    %v326 = vpop.trf.xlu0
    %v327 = vpop.trf.xlu0
    %v328 = vpop.trf.xlu0
    %v329 = vld [vmem:[%s7] sm:$0xff]
    %v330 = vld [vmem:[%s7 + $0x8] sm:$0xff]
    %332 = vset.pattern.permute.xlu0 0
    %333 = vperm.xlu0 %332, %v329
    %v334 = vpop.permute.xlu0 %333
    %337 = vset.pattern.permute.xlu0 0
    %338 = vperm.xlu0 %337, %v330
    %v339 = vpop.permute.xlu0 %338
    %v341 = vmul.f32 %v313, %v334
    %v342 = vmul.f32 %v314, %v339
    %vm343 = vcmask 64512
    %v344 = vsel %vm343, %v341, 0.0
    %v345 = vsel %vm343, %v342, 0.0
    %v346 = vadd.f32 %v344, %v345
    %v347 = vrot.slane %v346, 4
    %v348 = vadd.f32 %v346, %v347
    %v349 = vrot.slane %v348, 2
    %v350 = vadd.f32 %v348, %v349
    %v351 = vrot.slane %v350, 1
    %v352 = vadd.f32 %v350, %v351
    %v353 = vld [vmem:[#allocation2] sm:$0x1]
    %355 = vset.pattern.permute.xlu0 0
    %356 = vperm.xlu0 %355, %v353
    %v357 = vpop.permute.xlu0 %356
    %v359 = vlaneseq
    %v360 = vshrl.u32 %v359, 7
    %v361 = vsub.s32 0, %v360
    %v362 = vrot.slane %v357, %v361
    %v363 = vadd.f32 %v352, %v362
    %v364 = vxor.u32 %v363, 2147483648
    %v365 = vmul.f32 %v364, 1.442695
    %v366 = vpow.pop %v365
    %v367 = vadd.f32 %v366, 1.0
    %v368 = vrcp.pop %v367
    %v369 = vmul.f32 1.0, %v368
    %vm370 = vcmask 57344
    %371 = vst.msk [vmem:[#allocation3] sm:$0x1] %vm370, %v369
    // Predicated region
    $region38: #{tpu_custom_call.1} parent=1 // pred_check
      _
    $region39: #{tpu_custom_call.1} parent=1 // pred_check_branch
      %373 = sbr.rel (0) target = $region41
    $region40: #{tpu_custom_call.1} parent=1 // pred_region
      %s375 = ssub.s32 16, 16
      %376 = vsyncadd [#allocation4], %s375
      %s378 = sshll.u32 [#allocation3], 4
      %s379 = int_to_ptr.vmem [resolvable:$true] %s378
      %381 = dma.vmem_to_hbm [thread:$0]  %s379, 16, %s9, [#allocation4]
    $region41: #{tpu_custom_call.1} parent=1 // pred_fallthru
      _
    // Predicated region
    $region42: #{tpu_custom_call.1} parent=1 // pred_check
      _
    $region43: #{tpu_custom_call.1} parent=1 // pred_check_branch
      %383 = sbr.rel (0) target = $region45
    $region44: #{tpu_custom_call.1} parent=1 // pred_region
      %384 = dma.done [#allocation4], 16
    $region45: #{tpu_custom_call.1} parent=1 // pred_fallthru
      _
    %385 = vsyncpa [#allocation4], 1

</llo_original>
